<compile_context>
chip_gen: v6e
topology: v6e:2x2x1
jax: 0.10.0
libtpu: 0.0.40
codegen_flags: <defaults>
</compile_context>

<pallas_src>
import functools

import jax
import jax.numpy as jnp
from jax.experimental import pallas as pl
from jax.experimental.pallas import tpu as pltpu


def _mlp_feature_map_kernel(x_ref, w1_ref, b1_ref, w2_ref, b2_ref, o_ref):
    # x_ref: (TMF, fold*D); w1: (fold*D, fold*F); b1/b2: (1, fold*F) f32;
    # w2: (fold*F, fold*F); o_ref: (TMF, fold*F)
    x = x_ref[...]  # native dtype -> MXU (bf16 x bf16 or f32 x f32), f32 accumulate

    # Linear 1 + ReLU (block-diagonal weights act independently per original row)
    h = jnp.dot(x, w1_ref[...], preferred_element_type=jnp.float32)
    h = jnp.maximum(h + b1_ref[...], 0.0)

    # Linear 2 + Softplus (PyTorch default: beta=1, threshold=20 -> identity above 20)
    z = jnp.dot(h.astype(w2_ref.dtype), w2_ref[...],
                preferred_element_type=jnp.float32)
    z = z + b2_ref[...]
    sp = jnp.where(z > 20.0, z, jnp.log1p(jnp.exp(jnp.minimum(z, 20.0))))

    o_ref[...] = sp.astype(o_ref.dtype)


def _round_up(n, m):
    return ((n + m - 1) // m) * m


def _pick_fold(n_rows, d, f, max_lanes=512):
    """Largest power-of-two row fold that divides n_rows, aims for >=128 lanes on
    both the input (fold*d) and output (fold*f) sides, and caps lane width."""
    target = 1
    while target * min(d, f) < 128 and 2 * target * max(d, f) <= max_lanes:
        target *= 2
    fold = target
    while fold > 1 and n_rows % fold != 0:
        fold //= 2
    return fold


@functools.partial(jax.jit, static_argnames=("tm", "out_dtype"))
def learnable_kernel_feature_map(x, w1, b1, w2, b2, *, tm=4096, out_dtype=None):
    """x: (B, S, H, D) -> (B, S, H, F).  `tm` is the row tile in ORIGINAL rows."""
    B, S, H, D = x.shape
    F = w1.shape[1]
    N = B * S * H
    out_dtype = x.dtype if out_dtype is None else out_dtype
    compute_dtype = x.dtype  # feed the MXU in the activation dtype (bf16 stays bf16)

    # ---- lane-dense row folding (wrapper reshapes are free: identical HBM bytes) ----
    fold = _pick_fold(N, D, F)
    Nf, Df, Ff = N // fold, fold * D, fold * F
    x_f = x.reshape(Nf, Df)

    # Block-diagonal weights reproduce the per-row MLP on folded rows exactly
    # (the off-diagonal zeros contribute exact 0.0 partial products).
    w1_bd = jnp.kron(jnp.eye(fold, dtype=w1.dtype), w1).astype(compute_dtype)  # (Df, Ff)
    w2_bd = jnp.kron(jnp.eye(fold, dtype=w2.dtype), w2).astype(compute_dtype)  # (Ff, Ff)
    b1_f = jnp.tile(b1.astype(jnp.float32).reshape(1, F), (1, fold))           # (1, Ff)
    b2_f = jnp.tile(b2.astype(jnp.float32).reshape(1, F), (1, fold))           # (1, Ff)

    # ---- row tiling (in folded rows) ----
    tm_f = max(8, min(((tm // fold) // 8) * 8 or 8, _round_up(Nf, 8)))
    # Megacore clamp: if everything fits in one tile but there's real work, split
    # into >=2 row tiles so both TensorCores on v7x stay busy (neutral elsewhere).
    if pl.cdiv(Nf, tm_f) < 2 and N >= 4096:
        tm_f = max(8, _round_up(pl.cdiv(Nf, 2), 8))
    grid_rows = pl.cdiv(Nf, tm_f)

    cost = pl.CostEstimate(
        flops=2 * N * (D * F + F * F) + 4 * N * F,
        transcendentals=2 * N * F,
        bytes_accessed=N * D * x.dtype.itemsize
        + N * F * jnp.dtype(out_dtype).itemsize
        + (Df * Ff + Ff * Ff + 2 * Ff) * jnp.dtype(compute_dtype).itemsize,
    )

    out_f = pl.pallas_call(
        _mlp_feature_map_kernel,
        out_shape=jax.ShapeDtypeStruct((Nf, Ff), out_dtype),
        grid_spec=pltpu.PrefetchScalarGridSpec(
            num_scalar_prefetch=0,
            grid=(grid_rows,),
            in_specs=[
                pl.BlockSpec((tm_f, Df), lambda i: (i, 0)),  # activations, row-tiled
                pl.BlockSpec((Df, Ff), lambda i: (0, 0)),    # w1 block-diag (resident)
                pl.BlockSpec((1, Ff), lambda i: (0, 0)),     # b1 (f32)
                pl.BlockSpec((Ff, Ff), lambda i: (0, 0)),    # w2 block-diag (resident)
                pl.BlockSpec((1, Ff), lambda i: (0, 0)),     # b2 (f32)
            ],
            out_specs=pl.BlockSpec((tm_f, Ff), lambda i: (i, 0)),
        ),
        compiler_params=pltpu.CompilerParams(
            # Row tiles are independent: lets Mosaic shard them across both
            # TensorCores on v7x; neutral on v5e/v6e.
            dimension_semantics=("parallel",),
        ),
        cost_estimate=cost,
    )(x_f, w1_bd, b1_f, w2_bd, b2_f)

    return out_f.reshape(B, S, H, F)


def _reference(x, w1, b1, w2, b2):
    B, S, H, D = x.shape
    x2d = x.reshape(-1, D).astype(jnp.float32)
    h = jnp.maximum(x2d @ w1.astype(jnp.float32) + b1.astype(jnp.float32), 0.0)
    z = h @ w2.astype(jnp.float32) + b2.astype(jnp.float32)
    sp = jnp.where(z > 20.0, z, jnp.log1p(jnp.exp(jnp.minimum(z, 20.0))))
    return sp.reshape(B, S, H, -1)


if __name__ == "__main__":
    # Small shapes consistent with the module's forward.
    batch, seq, heads, head_dim, num_features = 2, 8, 4, 16, 32

    key = jax.random.PRNGKey(0)
    kx, k1, k2, k3, k4 = jax.random.split(key, 5)

    x = jax.random.normal(kx, (batch, seq, heads, head_dim), dtype=jnp.float32)

    # Deterministic parameter init (uniform, PyTorch-Linear-like bound 1/sqrt(fan_in)).
    bound1 = 1.0 / (head_dim ** 0.5)
    bound2 = 1.0 / (num_features ** 0.5)
    w1 = jax.random.uniform(k1, (head_dim, num_features), jnp.float32, -bound1, bound1)
    b1 = jax.random.uniform(k2, (num_features,), jnp.float32, -bound1, bound1)
    w2 = jax.random.uniform(k3, (num_features, num_features), jnp.float32, -bound2, bound2)
    b2 = jax.random.uniform(k4, (num_features,), jnp.float32, -bound2, bound2)

    # f32 path: tight check against the pure-JAX reference.
    out = learnable_kernel_feature_map(x, w1, b1, w2, b2)
    out = jax.block_until_ready(out)
    ref = _reference(x, w1, b1, w2, b2)
    assert out.shape == (batch, seq, heads, num_features), out.shape
    assert jnp.allclose(out, ref.astype(out.dtype), atol=1e-5, rtol=1e-5), "mismatch vs reference"

    # bf16-output path (halves the dominant HBM write stream): loose check.
    out_bf16 = jax.block_until_ready(
        learnable_kernel_feature_map(x, w1, b1, w2, b2, out_dtype=jnp.bfloat16))
    assert out_bf16.dtype == jnp.bfloat16
    assert jnp.allclose(out_bf16.astype(jnp.float32), ref, atol=5e-2, rtol=5e-2), \
        "bf16 output mismatch vs reference"

    print("KERNEL_OK")
</pallas_src>

<mosaic_0001>
module attributes {stable_mosaic.version = 11 : i64} {
  func.func @_mlp_feature_map_kernel(%arg0: i32, %arg1: memref<8x128xf32, #tpu.memory_space<vmem>>, %arg2: memref<128x256xf32, #tpu.memory_space<vmem>>, %arg3: memref<1x256xf32, #tpu.memory_space<vmem>>, %arg4: memref<256x256xf32, #tpu.memory_space<vmem>>, %arg5: memref<1x256xf32, #tpu.memory_space<vmem>>, %arg6: memref<8x256xf32, #tpu.memory_space<vmem>>) attributes {dimension_semantics = [#tpu.dimension_semantics<parallel>], iteration_bounds = array<i64: 1>, scalar_prefetch = 0 : i64, scratch_operands = 0 : i64, tpu.core_type = #tpu.core_type<tc>, window_params = [{transform_indices = @transform_0, window_bounds = array<i64: 8, 128>}, {pipeline_mode = #tpu.pipeline_mode<synchronous>, transform_indices = @transform_1, window_bounds = array<i64: 128, 256>}, {pipeline_mode = #tpu.pipeline_mode<synchronous>, transform_indices = @transform_2, window_bounds = array<i64: 1, 256>}, {pipeline_mode = #tpu.pipeline_mode<synchronous>, transform_indices = @transform_3, window_bounds = array<i64: 256, 256>}, {pipeline_mode = #tpu.pipeline_mode<synchronous>, transform_indices = @transform_4, window_bounds = array<i64: 1, 256>}, {transform_indices = @transform_5, window_bounds = array<i64: 8, 256>}]} {
    %c0 = arith.constant 0 : index
    %c0_0 = arith.constant 0 : index
    %0 = vector.load %arg1[%c0, %c0_0] : memref<8x128xf32, #tpu.memory_space<vmem>>, vector<8x128xf32>
    %c0_1 = arith.constant 0 : index
    %c0_2 = arith.constant 0 : index
    %1 = vector.load %arg2[%c0_1, %c0_2] : memref<128x256xf32, #tpu.memory_space<vmem>>, vector<128x256xf32>
    %cst = arith.constant dense<0.000000e+00> : vector<8x256xf32>
    %2 = tpu.matmul %0, %1, %cst {dimension_numbers = #tpu.dot_dimension_numbers<[1], [0], [0], [1], [0, 0, 1, 1], [], []>} : vector<8x128xf32>, vector<128x256xf32>, vector<8x256xf32> -> vector<8x256xf32>
    %c0_3 = arith.constant 0 : index
    %c0_4 = arith.constant 0 : index
    %3 = vector.load %arg3[%c0_3, %c0_4] : memref<1x256xf32, #tpu.memory_space<vmem>>, vector<1x256xf32>
    %4 = vector.broadcast %3 : vector<1x256xf32> to vector<8x256xf32>
    %5 = arith.addf %2, %4 : vector<8x256xf32>
    %cst_5 = arith.constant 0.000000e+00 : f32
    %6 = vector.broadcast %cst_5 : f32 to vector<8x256xf32>
    %7 = arith.maximumf %5, %6 : vector<8x256xf32>
    %c0_6 = arith.constant 0 : index
    %c0_7 = arith.constant 0 : index
    %8 = vector.load %arg4[%c0_6, %c0_7] : memref<256x256xf32, #tpu.memory_space<vmem>>, vector<256x256xf32>
    %cst_8 = arith.constant dense<0.000000e+00> : vector<8x256xf32>
    %9 = tpu.matmul %7, %8, %cst_8 {dimension_numbers = #tpu.dot_dimension_numbers<[1], [0], [0], [1], [0, 0, 1, 1], [], []>} : vector<8x256xf32>, vector<256x256xf32>, vector<8x256xf32> -> vector<8x256xf32>
    %c0_9 = arith.constant 0 : index
    %c0_10 = arith.constant 0 : index
    %10 = vector.load %arg5[%c0_9, %c0_10] : memref<1x256xf32, #tpu.memory_space<vmem>>, vector<1x256xf32>
    %11 = vector.broadcast %10 : vector<1x256xf32> to vector<8x256xf32>
    %12 = arith.addf %9, %11 : vector<8x256xf32>
    %cst_11 = arith.constant 2.000000e+01 : f32
    %13 = vector.broadcast %cst_11 : f32 to vector<8x256xf32>
    %14 = arith.cmpf ogt, %12, %13 : vector<8x256xf32>
    %cst_12 = arith.constant 2.000000e+01 : f32
    %15 = vector.broadcast %cst_12 : f32 to vector<8x256xf32>
    %16 = arith.minimumf %12, %15 : vector<8x256xf32>
    %17 = math.exp %16 : vector<8x256xf32>
    %18 = math.log1p %17 : vector<8x256xf32>
    %19 = arith.select %14, %12, %18 : vector<8x256xi1>, vector<8x256xf32>
    %c0_13 = arith.constant 0 : index
    %c0_14 = arith.constant 0 : index
    %20 = vector.load %arg6[%c0_13, %c0_14] : memref<8x256xf32, #tpu.memory_space<vmem>>, vector<8x256xf32>
    tpu.vector_store %arg6[%c0_13, %c0_14], %19 {strides = array<i32>} : memref<8x256xf32, #tpu.memory_space<vmem>>, vector<8x256xf32>,
    return
  }
  func.func @transform_0(%arg0: i32) -> (i32, i32) {
    %c0_i32 = arith.constant 0 : i32
    %c0_i32_0 = arith.constant 0 : i32
    return %arg0, %c0_i32 : i32, i32
  }
  func.func @transform_1(%arg0: i32) -> (i32, i32) {
    %c0_i32 = arith.constant 0 : i32
    %c0_i32_0 = arith.constant 0 : i32
    %c0_i32_1 = arith.constant 0 : i32
    return %c0_i32, %c0_i32_0 : i32, i32
  }
  func.func @transform_2(%arg0: i32) -> (i32, i32) {
    %c0_i32 = arith.constant 0 : i32
    %c0_i32_0 = arith.constant 0 : i32
    %c0_i32_1 = arith.constant 0 : i32
    return %c0_i32, %c0_i32_0 : i32, i32
  }
  func.func @transform_3(%arg0: i32) -> (i32, i32) {
    %c0_i32 = arith.constant 0 : i32
    %c0_i32_0 = arith.constant 0 : i32
    %c0_i32_1 = arith.constant 0 : i32
    return %c0_i32, %c0_i32_0 : i32, i32
  }
  func.func @transform_4(%arg0: i32) -> (i32, i32) {
    %c0_i32 = arith.constant 0 : i32
    %c0_i32_0 = arith.constant 0 : i32
    %c0_i32_1 = arith.constant 0 : i32
    return %c0_i32, %c0_i32_0 : i32, i32
  }
  func.func @transform_5(%arg0: i32) -> (i32, i32) {
    %c0_i32 = arith.constant 0 : i32
    %c0_i32_0 = arith.constant 0 : i32
    return %arg0, %c0_i32 : i32, i32
  }
}

</mosaic_0001>

<llo_original>
// kernel: learnable_kernel_feature_map.1
$region0: #{learnable_kernel_feature_map.1}
  #allocation0 [shape = 'u32[]', space=smem, size = 0x4, offset = 0x4, fixed_abs, tag = 'smem constant byte address 0x4 - core index']
  #allocation1 [shape = 'u32[144,128]{1,0:T(1,128)}', space=vmem, size = 0x12000, scoped, tag = 'internal scratch']
  %s0 = inlined_call_operand.vmem [shape: f32[8,128], index: 0, kind: input, shape index: {}]
  %s1 = inlined_call_operand.vmem [shape: f32[128,256], index: 1, kind: input, shape index: {}]
  %s2 = inlined_call_operand.vmem [shape: f32[1,256], index: 2, kind: input, shape index: {}]
  %s3 = inlined_call_operand.vmem [shape: f32[256,256], index: 3, kind: input, shape index: {}]
  %s4 = inlined_call_operand.vmem [shape: f32[1,256], index: 4, kind: input, shape index: {}]
  %s5 = inlined_call_operand.vmem [shape: f32[8,256], index: 5, kind: output, shape index: {}]
  %s6 = sld [smem:[#allocation0]]
  $region30: #{learnable_kernel_feature_map.1} parent=0
    _
  %s8 = ssub.s32 1, %s6
  %s9 = scalar_select 0, %s8, %s6
  // Predicated region
  $region2: #{learnable_kernel_feature_map.1} parent=0 // pred_check
    _
  $region3: #{learnable_kernel_feature_map.1} parent=0 // pred_check_branch
    %11 = sbr.rel (0) target = $region5
  $region4: #{learnable_kernel_feature_map.1} parent=0 // pred_region
    _
  $region5: #{learnable_kernel_feature_map.1} parent=0 // pred_fallthru
    _
  // Predicated region
  $region6: #{learnable_kernel_feature_map.1} parent=0 // pred_check
    _
  $region7: #{learnable_kernel_feature_map.1} parent=0 // pred_check_branch
    %13 = sbr.rel (0) target = $region9
  $region8: #{learnable_kernel_feature_map.1} parent=0 // pred_region
    _
  $region9: #{learnable_kernel_feature_map.1} parent=0 // pred_fallthru
    _
  // Predicated region
  $region10: #{learnable_kernel_feature_map.1} parent=0 // pred_check
    _
  $region11: #{learnable_kernel_feature_map.1} parent=0 // pred_check_branch
    %15 = sbr.rel (0) target = $region13
  $region12: #{learnable_kernel_feature_map.1} parent=0 // pred_region
    _
  $region13: #{learnable_kernel_feature_map.1} parent=0 // pred_fallthru
    _
  // Predicated region
  $region14: #{learnable_kernel_feature_map.1} parent=0 // pred_check
    _
  $region15: #{learnable_kernel_feature_map.1} parent=0 // pred_check_branch
    %17 = sbr.rel (0) target = $region17
  $region16: #{learnable_kernel_feature_map.1} parent=0 // pred_region
    _
  $region17: #{learnable_kernel_feature_map.1} parent=0 // pred_fallthru
    _
  // Predicated region
  $region18: #{learnable_kernel_feature_map.1} parent=0 // pred_check
    _
  $region19: #{learnable_kernel_feature_map.1} parent=0 // pred_check_branch
    %19 = sbr.rel (0) target = $region21
  $region20: #{learnable_kernel_feature_map.1} parent=0 // pred_region
    _
  $region21: #{learnable_kernel_feature_map.1} parent=0 // pred_fallthru
    _
  %v20 = vld [vmem:[%s0] sm:$0xff]
  %v21 = vld [vmem:[%s1] sm:$0xff]
  %v22 = vld [vmem:[%s1 + $0x8] sm:$0xff]
  %v23 = vld [vmem:[%s1 + $0x10] sm:$0xff]
  %v24 = vld [vmem:[%s1 + $0x18] sm:$0xff]
  %v25 = vld [vmem:[%s1 + $0x20] sm:$0xff]
  %v26 = vld [vmem:[%s1 + $0x28] sm:$0xff]
  %v27 = vld [vmem:[%s1 + $0x30] sm:$0xff]
  %v28 = vld [vmem:[%s1 + $0x38] sm:$0xff]
  %v29 = vld [vmem:[%s1 + $0x40] sm:$0xff]
  %v30 = vld [vmem:[%s1 + $0x48] sm:$0xff]
  %v31 = vld [vmem:[%s1 + $0x50] sm:$0xff]
  %v32 = vld [vmem:[%s1 + $0x58] sm:$0xff]
  %v33 = vld [vmem:[%s1 + $0x60] sm:$0xff]
  %v34 = vld [vmem:[%s1 + $0x68] sm:$0xff]
  %v35 = vld [vmem:[%s1 + $0x70] sm:$0xff]
  %v36 = vld [vmem:[%s1 + $0x78] sm:$0xff]
  %v37 = vld [vmem:[%s1 + $0x80] sm:$0xff]
  %v38 = vld [vmem:[%s1 + $0x88] sm:$0xff]
  %v39 = vld [vmem:[%s1 + $0x90] sm:$0xff]
  %v40 = vld [vmem:[%s1 + $0x98] sm:$0xff]
  %v41 = vld [vmem:[%s1 + $0xa0] sm:$0xff]
  %v42 = vld [vmem:[%s1 + $0xa8] sm:$0xff]
  %v43 = vld [vmem:[%s1 + $0xb0] sm:$0xff]
  %v44 = vld [vmem:[%s1 + $0xb8] sm:$0xff]
  %v45 = vld [vmem:[%s1 + $0xc0] sm:$0xff]
  %v46 = vld [vmem:[%s1 + $0xc8] sm:$0xff]
  %v47 = vld [vmem:[%s1 + $0xd0] sm:$0xff]
  %v48 = vld [vmem:[%s1 + $0xd8] sm:$0xff]
  %v49 = vld [vmem:[%s1 + $0xe0] sm:$0xff]
  %v50 = vld [vmem:[%s1 + $0xe8] sm:$0xff]
  %v51 = vld [vmem:[%s1 + $0xf0] sm:$0xff]
  %v52 = vld [vmem:[%s1 + $0xf8] sm:$0xff]
  %v53 = vld [vmem:[%s2] sm:$0x3]
  %v55 = vlaneseq
  %v56 = vshrl.u32 %v55, 7
  %v57 = vsub.s32 0, %v56
  %v58 = vrot.slane %v53, %v57
  %v59 = vlaneseq
  %v60 = vshrl.u32 %v59, 7
  %v61 = vsub.s32 1, %v60
  %v62 = vrot.slane %v53, %v61
  %65 = vmatprep.subr.mxu0 %v52
  %66 = vmatpush1.msra.mxu0 %v51
  %67 = vmatprep.subr.mxu0 %v50
  %68 = vmatpush1.msra.mxu0 %v49
  %69 = vmatprep.subr.mxu0 %v48
  %70 = vmatpush1.msra.mxu0 %v47
  %71 = vmatprep.subr.mxu0 %v46
  %72 = vmatpush1.msra.mxu0 %v45
  %73 = vmatprep.subr.mxu0 %v44
  %74 = vmatpush1.msra.mxu0 %v43
  %75 = vmatprep.subr.mxu0 %v42
  %76 = vmatpush1.msra.mxu0 %v41
  %77 = vmatprep.subr.mxu0 %v40
  %78 = vmatpush1.msra.mxu0 %v39
  %79 = vmatprep.subr.mxu0 %v38
  %80 = vmatpush1.msra.mxu0 %v37
  %81 = vmatprep.subr.mxu0 %v36
  %82 = vmatpush1.msra.mxu0 %v35
  %83 = vmatprep.subr.mxu0 %v34
  %84 = vmatpush1.msra.mxu0 %v33
  %85 = vmatprep.subr.mxu0 %v32
  %86 = vmatpush1.msra.mxu0 %v31
  %87 = vmatprep.subr.mxu0 %v30
  %88 = vmatpush1.msra.mxu0 %v29
  %89 = vmatprep.subr.mxu0 %v28
  %90 = vmatpush1.msra.mxu0 %v27
  %91 = vmatprep.subr.mxu0 %v26
  %92 = vmatpush1.msra.mxu0 %v25
  %93 = vmatprep.subr.mxu0 %v24
  %94 = vmatpush1.msra.mxu0 %v23
  %95 = vmatprep.subr.mxu0 %v22
  %96 = vmatpush1.msra.mxu0 %v21
  %97 = vmatprep.subr.mxu0 0.0
  %98 = vmatpush2.msra.mxu0 0.0
  %99 = vmatprep.subr.mxu0 0.0
  %100 = vmatpush2.msra.mxu0 0.0
  %101 = vmatprep.subr.mxu0 0.0
  %102 = vmatpush2.msra.mxu0 0.0
  %103 = vmatprep.subr.mxu0 0.0
  %104 = vmatpush2.msra.mxu0 0.0
  %105 = vmatprep.subr.mxu0 0.0
  %106 = vmatpush2.msra.mxu0 0.0
  %107 = vmatprep.subr.mxu0 0.0
  %108 = vmatpush2.msra.mxu0 0.0
  %109 = vmatprep.subr.mxu0 0.0
  %110 = vmatpush2.msra.mxu0 0.0
  %111 = vmatprep.subr.mxu0 0.0
  %112 = vmatpush2.msra.mxu0 0.0
  %113 = vmatprep.subr.mxu0 0.0
  %114 = vmatpush2.msra.mxu0 0.0
  %115 = vmatprep.subr.mxu0 0.0
  %116 = vmatpush2.msra.mxu0 0.0
  %117 = vmatprep.subr.mxu0 0.0
  %118 = vmatpush2.msra.mxu0 0.0
  %119 = vmatprep.subr.mxu0 0.0
  %120 = vmatpush2.msra.mxu0 0.0
  %121 = vmatprep.subr.mxu0 0.0
  %122 = vmatpush2.msra.mxu0 0.0
  %123 = vmatprep.subr.mxu0 0.0
  %124 = vmatpush2.msra.mxu0 0.0
  %125 = vmatprep.subr.mxu0 0.0
  %126 = vmatpush2.msra.mxu0 0.0
  %127 = vmatprep.subr.mxu0 0.0
  %128 = vmatpush2.msra.mxu0 0.0
  %129 = vmatprep.mubr.f32.mxu0 0.0
  %130 = vmatmul.mubr.f32.gmra.mxu0 %v20
  %v131 = vpop.f32.mrf.mxu0
  %v132 = vadd.f32 %v58, %v131
  %v133 = vpop.f32.mrf.mxu0
  %v134 = vadd.f32 %v62, %v133
  %135 = vdwg.mxu0
  %v136 = vmax.f32 %v132, 0.0
  %v137 = vmax.f32 %v134, 0.0
  %v138 = vld [vmem:[%s3] sm:$0xff]
  %v139 = vld [vmem:[%s3 + $0x8] sm:$0xff]
  %v140 = vld [vmem:[%s3 + $0x10] sm:$0xff]
  %v141 = vld [vmem:[%s3 + $0x18] sm:$0xff]
  %v142 = vld [vmem:[%s3 + $0x20] sm:$0xff]
  %v143 = vld [vmem:[%s3 + $0x28] sm:$0xff]
  %v144 = vld [vmem:[%s3 + $0x30] sm:$0xff]
  %v145 = vld [vmem:[%s3 + $0x38] sm:$0xff]
  %v146 = vld [vmem:[%s3 + $0x40] sm:$0xff]
  %v147 = vld [vmem:[%s3 + $0x48] sm:$0xff]
  %v148 = vld [vmem:[%s3 + $0x50] sm:$0xff]
  %v149 = vld [vmem:[%s3 + $0x58] sm:$0xff]
  %v150 = vld [vmem:[%s3 + $0x60] sm:$0xff]
  %v151 = vld [vmem:[%s3 + $0x68] sm:$0xff]
  %v152 = vld [vmem:[%s3 + $0x70] sm:$0xff]
  %v153 = vld [vmem:[%s3 + $0x78] sm:$0xff]
  %v154 = vld [vmem:[%s3 + $0x80] sm:$0xff]
  %v155 = vld [vmem:[%s3 + $0x88] sm:$0xff]
  %v156 = vld [vmem:[%s3 + $0x90] sm:$0xff]
  %v157 = vld [vmem:[%s3 + $0x98] sm:$0xff]
  %v158 = vld [vmem:[%s3 + $0xa0] sm:$0xff]
  %v159 = vld [vmem:[%s3 + $0xa8] sm:$0xff]
  %v160 = vld [vmem:[%s3 + $0xb0] sm:$0xff]
  %v161 = vld [vmem:[%s3 + $0xb8] sm:$0xff]
  %v162 = vld [vmem:[%s3 + $0xc0] sm:$0xff]
  %v163 = vld [vmem:[%s3 + $0xc8] sm:$0xff]
  %v164 = vld [vmem:[%s3 + $0xd0] sm:$0xff]
  %v165 = vld [vmem:[%s3 + $0xd8] sm:$0xff]
  %v166 = vld [vmem:[%s3 + $0xe0] sm:$0xff]
  %v167 = vld [vmem:[%s3 + $0xe8] sm:$0xff]
  %v168 = vld [vmem:[%s3 + $0xf0] sm:$0xff]
  %v169 = vld [vmem:[%s3 + $0xf8] sm:$0xff]
  %v170 = vld [vmem:[%s3 + $0x100] sm:$0xff]
  %v171 = vld [vmem:[%s3 + $0x108] sm:$0xff]
  %v172 = vld [vmem:[%s3 + $0x110] sm:$0xff]
  %v173 = vld [vmem:[%s3 + $0x118] sm:$0xff]
  %v174 = vld [vmem:[%s3 + $0x120] sm:$0xff]
  %v175 = vld [vmem:[%s3 + $0x128] sm:$0xff]
  %v176 = vld [vmem:[%s3 + $0x130] sm:$0xff]
  %v177 = vld [vmem:[%s3 + $0x138] sm:$0xff]
  %v178 = vld [vmem:[%s3 + $0x140] sm:$0xff]
  %v179 = vld [vmem:[%s3 + $0x148] sm:$0xff]
  %v180 = vld [vmem:[%s3 + $0x150] sm:$0xff]
  %v181 = vld [vmem:[%s3 + $0x158] sm:$0xff]
  %v182 = vld [vmem:[%s3 + $0x160] sm:$0xff]
  %v183 = vld [vmem:[%s3 + $0x168] sm:$0xff]
  %v184 = vld [vmem:[%s3 + $0x170] sm:$0xff]
  %v185 = vld [vmem:[%s3 + $0x178] sm:$0xff]
  %v186 = vld [vmem:[%s3 + $0x180] sm:$0xff]
  %v187 = vld [vmem:[%s3 + $0x188] sm:$0xff]
  %v188 = vld [vmem:[%s3 + $0x190] sm:$0xff]
  %v189 = vld [vmem:[%s3 + $0x198] sm:$0xff]
  %v190 = vld [vmem:[%s3 + $0x1a0] sm:$0xff]
  %v191 = vld [vmem:[%s3 + $0x1a8] sm:$0xff]
  %v192 = vld [vmem:[%s3 + $0x1b0] sm:$0xff]
  %v193 = vld [vmem:[%s3 + $0x1b8] sm:$0xff]
  %v194 = vld [vmem:[%s3 + $0x1c0] sm:$0xff]
  %v195 = vld [vmem:[%s3 + $0x1c8] sm:$0xff]
  %v196 = vld [vmem:[%s3 + $0x1d0] sm:$0xff]
  %v197 = vld [vmem:[%s3 + $0x1d8] sm:$0xff]
  %v198 = vld [vmem:[%s3 + $0x1e0] sm:$0xff]
  %v199 = vld [vmem:[%s3 + $0x1e8] sm:$0xff]
  %v200 = vld [vmem:[%s3 + $0x1f0] sm:$0xff]
  %v201 = vld [vmem:[%s3 + $0x1f8] sm:$0xff]
  %v202 = vld [vmem:[%s4] sm:$0x3]
  %v204 = vlaneseq
  %v205 = vshrl.u32 %v204, 7
  %v206 = vsub.s32 0, %v205
  %v207 = vrot.slane %v202, %v206
  %v208 = vlaneseq
  %v209 = vshrl.u32 %v208, 7
  %v210 = vsub.s32 1, %v209
  %v211 = vrot.slane %v202, %v210
  %214 = vmatprep.subr.mxu0 %v169
  %215 = vmatpush1.msra.mxu0 %v168
  %216 = vmatprep.subr.mxu0 %v167
  %217 = vmatpush1.msra.mxu0 %v166
  %218 = vmatprep.subr.mxu0 %v165
  %219 = vmatpush1.msra.mxu0 %v164
  %220 = vmatprep.subr.mxu0 %v163
  %221 = vmatpush1.msra.mxu0 %v162
  %222 = vmatprep.subr.mxu0 %v161
  %223 = vmatpush1.msra.mxu0 %v160
  %224 = vmatprep.subr.mxu0 %v159
  %225 = vmatpush1.msra.mxu0 %v158
  %226 = vmatprep.subr.mxu0 %v157
  %227 = vmatpush1.msra.mxu0 %v156
  %228 = vmatprep.subr.mxu0 %v155
  %229 = vmatpush1.msra.mxu0 %v154
  %230 = vmatprep.subr.mxu0 %v153
  %231 = vmatpush1.msra.mxu0 %v152
  %232 = vmatprep.subr.mxu0 %v151
  %233 = vmatpush1.msra.mxu0 %v150
  %234 = vmatprep.subr.mxu0 %v149
  %235 = vmatpush1.msra.mxu0 %v148
  %236 = vmatprep.subr.mxu0 %v147
  %237 = vmatpush1.msra.mxu0 %v146
  %238 = vmatprep.subr.mxu0 %v145
  %239 = vmatpush1.msra.mxu0 %v144
  %240 = vmatprep.subr.mxu0 %v143
  %241 = vmatpush1.msra.mxu0 %v142
  %242 = vmatprep.subr.mxu0 %v141
  %243 = vmatpush1.msra.mxu0 %v140
  %244 = vmatprep.subr.mxu0 %v139
  %245 = vmatpush1.msra.mxu0 %v138
  %246 = vmatprep.subr.mxu0 %v201
  %247 = vmatpush2.msra.mxu0 %v200
  %248 = vmatprep.subr.mxu0 %v199
  %249 = vmatpush2.msra.mxu0 %v198
  %250 = vmatprep.subr.mxu0 %v197
  %251 = vmatpush2.msra.mxu0 %v196
  %252 = vmatprep.subr.mxu0 %v195
  %253 = vmatpush2.msra.mxu0 %v194
  %254 = vmatprep.subr.mxu0 %v193
  %255 = vmatpush2.msra.mxu0 %v192
  %256 = vmatprep.subr.mxu0 %v191
  %257 = vmatpush2.msra.mxu0 %v190
  %258 = vmatprep.subr.mxu0 %v189
  %259 = vmatpush2.msra.mxu0 %v188
  %260 = vmatprep.subr.mxu0 %v187
  %261 = vmatpush2.msra.mxu0 %v186
  %262 = vmatprep.subr.mxu0 %v185
  %263 = vmatpush2.msra.mxu0 %v184
  %264 = vmatprep.subr.mxu0 %v183
  %265 = vmatpush2.msra.mxu0 %v182
  %266 = vmatprep.subr.mxu0 %v181
  %267 = vmatpush2.msra.mxu0 %v180
  %268 = vmatprep.subr.mxu0 %v179
  %269 = vmatpush2.msra.mxu0 %v178
  %270 = vmatprep.subr.mxu0 %v177
  %271 = vmatpush2.msra.mxu0 %v176
  %272 = vmatprep.subr.mxu0 %v175
  %273 = vmatpush2.msra.mxu0 %v174
  %274 = vmatprep.subr.mxu0 %v173
  %275 = vmatpush2.msra.mxu0 %v172
  %276 = vmatprep.subr.mxu0 %v171
  %277 = vmatpush2.msra.mxu0 %v170
  %278 = vmatprep.mubr.f32.mxu0 %v137
  %279 = vmatmul.mubr.f32.gmra.mxu0 %v136
  %v280 = vpop.f32.mrf.mxu0
  %v281 = vadd.f32 %v207, %v280
  %v282 = vpop.f32.mrf.mxu0
  %v283 = vadd.f32 %v211, %v282
  %284 = vdwg.mxu0
  %vm285 = vcmp.gt.f32.partialorder %v281, 20.0
  %vm286 = vcmp.gt.f32.partialorder %v283, 20.0
  %v287 = vmin.f32 %v281, 20.0
  %v288 = vmin.f32 %v283, 20.0
  %v289 = vmul.f32 %v287, 1.442695
  %v290 = vpow.pop %v289
  %v291 = vmul.f32 %v288, 1.442695
  %v292 = vpow.pop %v291
  %v293 = vadd.f32 %v290, 1.0
  %v294 = vlog2.pop %v293
  %v295 = vmul.f32 %v294, 0.6931472
  %v296 = vmul.f32 -0.5, %v290
  %v297 = vadd.f32 %v296, 1.0
  %v298 = vmul.f32 %v297, %v290
  %v299 = vand.u32 2147483647, %v290
  %vm300 = vcmp.lt.f32.partialorder %v299, 0.0004427343
  %v301 = vsel %vm300, %v298, %v295
  %v302 = vadd.f32 %v292, 1.0
  %v303 = vlog2.pop %v302
  %v304 = vmul.f32 %v303, 0.6931472
  %v305 = vmul.f32 -0.5, %v292
  %v306 = vadd.f32 %v305, 1.0
  %v307 = vmul.f32 %v306, %v292
  %v308 = vand.u32 2147483647, %v292
  %vm309 = vcmp.lt.f32.partialorder %v308, 0.0004427343
  %v310 = vsel %vm309, %v307, %v304
  %v311 = vsel %vm285, %v281, %v301
  %v312 = vsel %vm286, %v283, %v310
  %313 = vst [vmem:[%s5] sm:$0xff] %v311
  %314 = vst [vmem:[%s5 + $0x8] sm:$0xff] %v312
  // Predicated region
  $region22: #{learnable_kernel_feature_map.1} parent=0 // pred_check
    _
  $region23: #{learnable_kernel_feature_map.1} parent=0 // pred_check_branch
    %316 = sbr.rel (0) target = $region25
  $region24: #{learnable_kernel_feature_map.1} parent=0 // pred_region
    _
  $region25: #{learnable_kernel_feature_map.1} parent=0 // pred_fallthru
    _
  // Predicated region
  $region26: #{learnable_kernel_feature_map.1} parent=0 // pred_check
    _
  $region27: #{learnable_kernel_feature_map.1} parent=0 // pred_check_branch
    %318 = sbr.rel (0) target = $region29
  $region28: #{learnable_kernel_feature_map.1} parent=0 // pred_region
    _
  $region29: #{learnable_kernel_feature_map.1} parent=0 // pred_fallthru
    _

</llo_original>
